<compile_context>
chip_gen: v7x
topology: tpu7x:2x2x1
jax: 0.10.0
libtpu: 0.0.40
codegen_flags: <defaults>
</compile_context>

<pallas_src>
import functools
import math

import jax
import jax.numpy as jnp
from jax import lax
from jax.experimental import pallas as pl
from jax.experimental.pallas import tpu as pltpu


_EDGE = 8  # sublane-aligned zero halo around the pooled channel vector (>= max pad)


# ------------------------------ small helpers ---------------------------------

def _eca_kernel_size(channel: int, b: int = 1, gamma: int = 2) -> int:
    k = int(abs((math.log(channel, 2) + b) / gamma))
    return k if k % 2 else k + 1


def _round_up(n: int, m: int) -> int:
    return -(-n // m) * m


def _largest_divisor_leq(n: int, cap: int) -> int:
    for d in range(max(1, min(n, cap)), 0, -1):
        if n % d == 0:
            return d
    return 1


def _vmem_limit_bytes() -> int:
    """Generation-aware scoped-VMEM limit (v7x: 64 MiB phys, v5e/v6e: 128 MiB)."""
    try:
        cap = int(pltpu.get_tpu_info().vmem_capacity_bytes)
    except Exception:
        cap = 64 * 1024 * 1024  # conservative default (v7x)
    return max(32 * 1024 * 1024, min(cap - 12 * 1024 * 1024, 100 * 1024 * 1024))


def _pick_channel_tile(C: int, hw_pad: int, max_elems: int):
    """Largest multiple-of-8 divisor of C whose (c_tile, HW) block fits the budget."""
    if C % 8:
        return None
    cap = min(C, (max_elems // max(1, hw_pad)) // 8 * 8)
    if cap < 8:
        return None
    best = None
    for ct in range(8, cap + 1, 8):
        if C % ct == 0:
            best = ct
    return best


def _buffered_spec(block_shape, index_map, n):
    """BlockSpec with n-deep pipelining if this jax version supports it."""
    try:
        return pl.BlockSpec(block_shape, index_map, pipeline_mode=pl.Buffered(n))
    except Exception:
        return pl.BlockSpec(block_shape, index_map)


def _conv_hsigmoid(win, w_ref, *, k, pad, n):
    """k-tap channel conv + h_sigmoid on a pooled window.

    win: (R, n + 2*_EDGE, 1) f32; rows [_EDGE, _EDGE + n) are the target
    channels, neighbouring rows hold valid neighbour pooled values or zeros.
    Returns h_sigmoid(conv) for the target channels: (R, n, 1) f32.
    """
    a0 = _EDGE - pad
    conv = w_ref[0] * win[:, a0:a0 + n, :]
    for t in range(1, k):                       # k is 3 or 5 -> fully unrolled
        a = a0 + t
        conv = conv + w_ref[t] * win[:, a:a + n, :]
    # h_sigmoid(x) = ReLU6(x + 3) / 6
    return jnp.clip(conv + 3.0, 0.0, 6.0) * (1.0 / 6.0)


# --------------------------- path 1: fused full slab ---------------------------

def _eca_fused_kernel(w_ref, x_ref, o_ref, pool_ref, *, k, pad, inv_hw):
    # w_ref: (k,) f32 SMEM; x_ref/o_ref: (tb, C, HW) native dtype.
    x = x_ref[...]
    C = x_ref.shape[1]
    ssum = jnp.sum(x, axis=-1, keepdims=True, dtype=jnp.float32)   # f32 accumulation
    smax = jnp.max(x, axis=-1, keepdims=True).astype(jnp.float32)
    pooled = ssum * inv_hw + smax                                  # (tb, C, 1) f32
    pool_ref[...] = jnp.zeros_like(pool_ref)                       # zero halo for edge taps
    pool_ref[:, _EDGE:_EDGE + C, :] = pooled
    y = _conv_hsigmoid(pool_ref[...], w_ref, k=k, pad=pad, n=C)    # (tb, C, 1) f32
    # f32 multiply, then cast once to the output dtype (matches the reference).
    o_ref[...] = (x.astype(jnp.float32) * y).astype(o_ref.dtype)


# ---------------------- path 2: channel-tiled fused (carry) --------------------

def _eca_channel_kernel(w_ref, x_ref, o_ref, pool_ref, prev_ref, *,
                        k, pad, inv_hw, c_tile, n_c):
    # Grid (B, n_c + 1).  At step c: pool channel chunk c, then emit the scaled
    # output of chunk c-1 (its x block was carried into prev_ref last step and
    # its conv halo is now fully available in pool_ref).  x is read exactly once.
    c = pl.program_id(1)

    @pl.when(c == 0)
    def _():
        pool_ref[...] = jnp.zeros_like(pool_ref)      # zero edges for the boundary taps

    @pl.when(c < n_c)
    def _():                                          # pool chunk c
        x = x_ref[...]                                # (1, c_tile, HW)
        ssum = jnp.sum(x, axis=-1, keepdims=True, dtype=jnp.float32)
        smax = jnp.max(x, axis=-1, keepdims=True).astype(jnp.float32)
        start = pl.multiple_of(_EDGE + c * c_tile, 8)
        pool_ref[:, pl.ds(start, c_tile), :] = ssum * inv_hw + smax

    @pl.when(c >= 1)
    def _():                                          # conv + scale for chunk c-1
        base = pl.multiple_of((c - 1) * c_tile, 8)    # aligned window load
        win = pool_ref[:, pl.ds(base, c_tile + 2 * _EDGE), :]
        y = _conv_hsigmoid(win, w_ref, k=k, pad=pad, n=c_tile)
        o_ref[...] = (prev_ref[...].astype(jnp.float32) * y).astype(o_ref.dtype)

    @pl.when(c < n_c)
    def _():                                          # carry chunk c for the next step
        prev_ref[...] = x_ref[...]


# -------------------- path 3: spatial two-pass (last resort) -------------------

def _eca_pool_kernel(w_ref, x_ref, y_ref, pool_ref, sum_ref, max_ref, *,
                     k, pad, inv_hw, hw, tile):
    t = pl.program_id(1)
    x = x_ref[...]                                    # (1, C, tile), ragged last tile
    C = x_ref.shape[1]
    gidx = t * tile + lax.broadcasted_iota(jnp.int32, x.shape, 2)
    valid = gidx < hw                                 # mask garbage in the ragged tail
    xf = x.astype(jnp.float32)
    psum = jnp.sum(jnp.where(valid, xf, 0.0), axis=-1, keepdims=True)
    pmax = jnp.max(jnp.where(valid, xf, -jnp.inf), axis=-1, keepdims=True)

    @pl.when(t == 0)
    def _():
        sum_ref[...] = psum
        max_ref[...] = pmax

    @pl.when(t > 0)
    def _():
        sum_ref[...] = sum_ref[...] + psum
        max_ref[...] = jnp.maximum(max_ref[...], pmax)

    @pl.when(t == pl.num_programs(1) - 1)
    def _():
        pool_ref[...] = jnp.zeros_like(pool_ref)
        pool_ref[:, _EDGE:_EDGE + C, :] = sum_ref[...] * inv_hw + max_ref[...]
        y_ref[...] = _conv_hsigmoid(pool_ref[...], w_ref, k=k, pad=pad, n=C)


def _eca_scale_kernel(x_ref, y_ref, o_ref):
    x = x_ref[...]                                    # (1, C, tile)
    o_ref[...] = (x.astype(jnp.float32) * y_ref[...]).astype(o_ref.dtype)


# ---------------------------------- wrapper ------------------------------------

def eca_h_layer(x: jnp.ndarray, conv_weight: jnp.ndarray, *,
                path: str | None = None,
                max_block_elems: int | None = None) -> jnp.ndarray:
    """x: (B, C, H, W) native dtype; conv_weight: (k,) Conv1d(1,1,k,bias=False) weight."""
    B, C, H, W = x.shape
    HW = H * W
    k = int(conv_weight.shape[0])
    assert k % 2 == 1, "ECA Conv1d kernel size must be odd"
    pad = (k - 1) // 2
    assert pad <= _EDGE
    # NOTE: the pooling trick conv(avg)+conv(max)==conv(avg+max) needs bias-free Conv1d.
    w = conv_weight.astype(jnp.float32).reshape(k)
    x_flat = x.reshape(B, C, HW)                      # no up-cast of the slab
    dt = x_flat.dtype
    itemsize = dt.itemsize
    inv_hw = 1.0 / float(HW)

    vmem_limit = _vmem_limit_bytes()
    if max_block_elems is None:
        # ~ 4 double-buffered native copies + carry + f32 temps per element.
        max_block_elems = (vmem_limit - 4 * 1024 * 1024) // (5 * itemsize + 8)

    c_pad = _round_up(C, 8)
    hw_pad = _round_up(HW, 128)
    slab_elems = c_pad * hw_pad

    def cparams(sem):
        return pltpu.CompilerParams(dimension_semantics=sem,
                                    vmem_limit_bytes=int(vmem_limit))

    smem_w = pl.BlockSpec(memory_space=pltpu.MemorySpace.SMEM)

    if path is None:
        if slab_elems <= max_block_elems:
            path = "fused"
        elif _pick_channel_tile(C, hw_pad, max_block_elems) is not None:
            path = "channel"
        else:
            path = "spatial"

    if path == "fused":
        # Read x once / write once; several batches per step when slabs are small.
        tb_cap = max(1, max_block_elems // max(1, slab_elems))
        tb = _largest_divisor_leq(B, tb_cap)
        # Aim for >=4 grid steps (pipeline overlap / megacore) but never shrink
        # a block below ~4 MiB.
        min_block_elems = (4 * 1024 * 1024) // itemsize
        while B // tb < 4 and tb > 1:
            cand = _largest_divisor_leq(B, tb - 1)
            if cand * slab_elems < min_block_elems:
                break
            tb = cand
        out_flat = pl.pallas_call(
            functools.partial(_eca_fused_kernel, k=k, pad=pad, inv_hw=inv_hw),
            out_shape=jax.ShapeDtypeStruct((B, C, HW), dt),
            grid_spec=pltpu.PrefetchScalarGridSpec(
                num_scalar_prefetch=0,
                grid=(B // tb,),
                in_specs=[smem_w,
                          pl.BlockSpec((tb, C, HW), lambda b: (b, 0, 0))],
                out_specs=pl.BlockSpec((tb, C, HW), lambda b: (b, 0, 0)),
                scratch_shapes=[pltpu.VMEM((tb, C + 2 * _EDGE, 1), jnp.float32)],
            ),
            compiler_params=cparams(("parallel",)),
        )(w, x_flat)

    elif path == "channel":
        c_tile = _pick_channel_tile(C, hw_pad, max_block_elems)
        assert c_tile is not None, "channel path needs C % 8 == 0 and a fitting tile"
        n_c = C // c_tile
        out_flat = pl.pallas_call(
            functools.partial(_eca_channel_kernel, k=k, pad=pad, inv_hw=inv_hw,
                              c_tile=c_tile, n_c=n_c),
            out_shape=jax.ShapeDtypeStruct((B, C, HW), dt),
            grid_spec=pltpu.PrefetchScalarGridSpec(
                num_scalar_prefetch=0,
                grid=(B, n_c + 1),
                in_specs=[smem_w,
                          pl.BlockSpec((1, c_tile, HW),
                                       lambda b, c: (b, jnp.minimum(c, n_c - 1), 0))],
                out_specs=pl.BlockSpec((1, c_tile, HW),
                                       lambda b, c: (b, jnp.maximum(c - 1, 0), 0)),
                scratch_shapes=[pltpu.VMEM((1, C + 2 * _EDGE, 1), jnp.float32),
                                pltpu.VMEM((1, c_tile, HW), dt)],
            ),
            compiler_params=cparams(("parallel", "arbitrary")),
        )(w, x_flat)

    else:  # "spatial": last resort, 3x HBM traffic (read x twice + write once).
        # >= 512 B contiguous per channel row in each strided DMA chunk.
        min_tile = _round_up(max(128, 512 // itemsize), 128)
        tile_cap = (max_block_elems // max(1, c_pad)) // 128 * 128
        tile = max(min_tile, min(tile_cap, hw_pad))
        n_t = pl.cdiv(HW, tile)
        y = pl.pallas_call(
            functools.partial(_eca_pool_kernel, k=k, pad=pad, inv_hw=inv_hw,
                              hw=HW, tile=tile),
            out_shape=jax.ShapeDtypeStruct((B, C, 1), jnp.float32),
            grid_spec=pltpu.PrefetchScalarGridSpec(
                num_scalar_prefetch=0,
                grid=(B, n_t),
                in_specs=[smem_w,
                          _buffered_spec((1, C, tile), lambda b, t: (b, 0, t), 3)],
                out_specs=pl.BlockSpec((1, C, 1), lambda b, t: (b, 0, 0)),
                scratch_shapes=[pltpu.VMEM((1, C + 2 * _EDGE, 1), jnp.float32),
                                pltpu.VMEM((1, C, 1), jnp.float32),
                                pltpu.VMEM((1, C, 1), jnp.float32)],
            ),
            compiler_params=cparams(("parallel", "arbitrary")),
        )(w, x_flat)
        out_flat = pl.pallas_call(
            _eca_scale_kernel,
            out_shape=jax.ShapeDtypeStruct((B, C, HW), dt),
            grid_spec=pltpu.PrefetchScalarGridSpec(
                num_scalar_prefetch=0,
                grid=(B, n_t),
                in_specs=[_buffered_spec((1, C, tile), lambda b, t: (b, 0, t), 3),
                          pl.BlockSpec((1, C, 1), lambda b, t: (b, 0, 0))],
                out_specs=pl.BlockSpec((1, C, tile), lambda b, t: (b, 0, t)),
            ),
            compiler_params=cparams(("parallel", "parallel")),
        )(x_flat, y)

    return out_flat.reshape(B, C, H, W)


# ---------------------------------- reference ----------------------------------

def _reference(x: jnp.ndarray, conv_weight: jnp.ndarray) -> jnp.ndarray:
    """Pure-JAX mirror of the PyTorch forward."""
    B, C, H, W = x.shape
    k = conv_weight.shape[0]
    pad = (k - 1) // 2
    xf = x.astype(jnp.float32)
    avg = jnp.mean(xf, axis=(2, 3))
    mx = jnp.max(xf, axis=(2, 3))

    def conv1d_c(v):  # v: (B, C)
        vp = jnp.pad(v, ((0, 0), (pad, pad)))
        out = jnp.zeros_like(v)
        for t in range(k):
            out = out + conv_weight[t] * vp[:, t:t + C]
        return out

    s = conv1d_c(avg) + conv1d_c(mx)
    y = jnp.clip(s + 3.0, 0.0, 6.0) / 6.0
    return (xf * y[:, :, None, None]).astype(x.dtype)


if __name__ == "__main__":
    key = jax.random.PRNGKey(0)
    k1, k2, k3, k4, kw3, kw5 = jax.random.split(key, 6)

    # 1) Default (fused single-pass) path.  C=16 -> ECA kernel_size 3.
    B, C, H, W = 2, 16, 8, 8
    ks3 = _eca_kernel_size(C)           # == 3
    w3 = jax.random.normal(kw3, (ks3,), jnp.float32) * (1.0 / math.sqrt(ks3))
    x1 = jax.random.normal(k1, (B, C, H, W), jnp.float32)
    o1 = jax.block_until_ready(eca_h_layer(x1, w3))
    r1 = _reference(x1, w3)
    assert o1.shape == x1.shape and o1.dtype == x1.dtype
    assert jnp.allclose(o1, r1, atol=1e-5, rtol=1e-5)

    # 2a) Channel-tiled fused path (forced small budget): C=24 -> k=3, 3 chunks of 8.
    x2 = jax.random.normal(k2, (2, 24, 8, 8), jnp.float32)
    o2 = jax.block_until_ready(
        eca_h_layer(x2, w3, path="channel", max_block_elems=8 * 128))
    assert jnp.allclose(o2, _reference(x2, w3), atol=1e-5, rtol=1e-5)

    # 2b) Channel-tiled path with k=5 halo: C=128 -> ECA kernel_size 5, 8 chunks of 16.
    ks5 = _eca_kernel_size(128)         # == 5
    w5 = jax.random.normal(kw5, (ks5,), jnp.float32) * (1.0 / math.sqrt(ks5))
    x3 = jax.random.normal(k3, (2, 128, 8, 8), jnp.float32)
    o3 = jax.block_until_ready(
        eca_h_layer(x3, w5, path="channel", max_block_elems=16 * 128))
    assert jnp.allclose(o3, _reference(x3, w5), atol=1e-5, rtol=1e-5)

    # 3) Spatial two-pass fallback with a ragged (non-128-multiple) HW = 144.
    x4 = jax.random.normal(k4, (2, 16, 12, 12), jnp.float32)
    o4 = jax.block_until_ready(
        eca_h_layer(x4, w3, path="spatial", max_block_elems=16 * 128))
    assert jnp.allclose(o4, _reference(x4, w3), atol=1e-5, rtol=1e-5)

    print("KERNEL_OK")
</pallas_src>

<mosaic_0001>
module attributes {stable_mosaic.version = 11 : i64} {
  func.func @_eca_fused_kernel(%arg0: i32, %arg1: memref<3xf32, #tpu.memory_space<smem>>, %arg2: memref<2x16x64xf32, #tpu.memory_space<vmem>>, %arg3: memref<2x16x64xf32, #tpu.memory_space<vmem>>, %arg4: memref<2x32x1xf32, #tpu.memory_space<vmem>>) attributes {dimension_semantics = [#tpu.dimension_semantics<parallel>], iteration_bounds = array<i64: 1>, scalar_prefetch = 0 : i64, scratch_operands = 1 : i64, tpu.core_type = #tpu.core_type<tc>, window_params = [{transform_indices = @transform_0, window_bounds = array<i64: 3>}, {transform_indices = @transform_1, window_bounds = array<i64: 2, 16, 64>}, {transform_indices = @transform_2, window_bounds = array<i64: 2, 16, 64>}]} {
    %c0 = arith.constant 0 : index
    %c0_0 = arith.constant 0 : index
    %c0_1 = arith.constant 0 : index
    %0 = vector.load %arg2[%c0, %c0_0, %c0_1] : memref<2x16x64xf32, #tpu.memory_space<vmem>>, vector<2x16x64xf32>
    %cst = arith.constant dense<0.000000e+00> : vector<2x16xf32>
    %1 = vector.multi_reduction <add>, %0, %cst [2] : vector<2x16x64xf32> to vector<2x16xf32>
    %2 = vector.shape_cast %1 : vector<2x16xf32> to vector<2x16x1xf32>
    %cst_2 = arith.constant dense<0xFF800000> : vector<2x16xf32>
    %3 = vector.multi_reduction <maximumf>, %0, %cst_2 [2] : vector<2x16x64xf32> to vector<2x16xf32>
    %4 = vector.shape_cast %3 : vector<2x16xf32> to vector<2x16x1xf32>
    %cst_3 = arith.constant 1.562500e-02 : f32
    %5 = vector.broadcast %cst_3 : f32 to vector<2x16x1xf32>
    %6 = arith.mulf %2, %5 : vector<2x16x1xf32>
    %7 = arith.addf %6, %4 : vector<2x16x1xf32>
    %cst_4 = arith.constant 0.000000e+00 : f32
    %8 = vector.broadcast %cst_4 : f32 to vector<2x32x1xf32>
    %c0_5 = arith.constant 0 : index
    %c0_6 = arith.constant 0 : index
    %c0_7 = arith.constant 0 : index
    %9 = vector.load %arg4[%c0_5, %c0_6, %c0_7] : memref<2x32x1xf32, #tpu.memory_space<vmem>>, vector<2x32x1xf32>
    tpu.vector_store %arg4[%c0_5, %c0_6, %c0_7], %8 {strides = array<i32>} : memref<2x32x1xf32, #tpu.memory_space<vmem>>, vector<2x32x1xf32>,
    %c0_8 = arith.constant 0 : index
    %c8 = arith.constant 8 : index
    %c0_9 = arith.constant 0 : index
    %10 = vector.load %arg4[%c0_8, %c8, %c0_9] : memref<2x32x1xf32, #tpu.memory_space<vmem>>, vector<2x16x1xf32>
    tpu.vector_store %arg4[%c0_8, %c8, %c0_9], %7 {strides = array<i32>} : memref<2x32x1xf32, #tpu.memory_space<vmem>>, vector<2x16x1xf32>,
    %c0_10 = arith.constant 0 : index
    %c0_11 = arith.constant 0 : index
    %c0_12 = arith.constant 0 : index
    %11 = vector.load %arg4[%c0_10, %c0_11, %c0_12] : memref<2x32x1xf32, #tpu.memory_space<vmem>>, vector<2x32x1xf32>
    %c0_13 = arith.constant 0 : index
    %12 = memref.load %arg1[%c0_13] : memref<3xf32, #tpu.memory_space<smem>>
    %13 = vector.extract_strided_slice %11 {offsets = [0, 7, 0], sizes = [2, 16, 1], strides = [1, 1, 1]} : vector<2x32x1xf32> to vector<2x16x1xf32>
    %14 = vector.broadcast %12 : f32 to vector<2x16x1xf32>
    %15 = arith.mulf %14, %13 : vector<2x16x1xf32>
    %c1 = arith.constant 1 : index
    %16 = memref.load %arg1[%c1] : memref<3xf32, #tpu.memory_space<smem>>
    %17 = vector.extract_strided_slice %11 {offsets = [0, 8, 0], sizes = [2, 16, 1], strides = [1, 1, 1]} : vector<2x32x1xf32> to vector<2x16x1xf32>
    %18 = vector.broadcast %16 : f32 to vector<2x16x1xf32>
    %19 = arith.mulf %18, %17 : vector<2x16x1xf32>
    %20 = arith.addf %15, %19 : vector<2x16x1xf32>
    %c2 = arith.constant 2 : index
    %21 = memref.load %arg1[%c2] : memref<3xf32, #tpu.memory_space<smem>>
    %22 = vector.extract_strided_slice %11 {offsets = [0, 9, 0], sizes = [2, 16, 1], strides = [1, 1, 1]} : vector<2x32x1xf32> to vector<2x16x1xf32>
    %23 = vector.broadcast %21 : f32 to vector<2x16x1xf32>
    %24 = arith.mulf %23, %22 : vector<2x16x1xf32>
    %25 = arith.addf %20, %24 : vector<2x16x1xf32>
    %cst_14 = arith.constant 3.000000e+00 : f32
    %26 = vector.broadcast %cst_14 : f32 to vector<2x16x1xf32>
    %27 = arith.addf %25, %26 : vector<2x16x1xf32>
    %cst_15 = arith.constant 0.000000e+00 : f32
    %cst_16 = arith.constant 6.000000e+00 : f32
    %28 = vector.broadcast %cst_15 : f32 to vector<2x16x1xf32>
    %29 = arith.maximumf %28, %27 : vector<2x16x1xf32>
    %30 = vector.broadcast %cst_16 : f32 to vector<2x16x1xf32>
    %31 = arith.minimumf %30, %29 : vector<2x16x1xf32>
    %cst_17 = arith.constant 0.166666672 : f32
    %32 = vector.broadcast %cst_17 : f32 to vector<2x16x1xf32>
    %33 = arith.mulf %31, %32 : vector<2x16x1xf32>
    %34 = vector.broadcast %33 : vector<2x16x1xf32> to vector<2x16x64xf32>
    %35 = arith.mulf %0, %34 : vector<2x16x64xf32>
    %c0_18 = arith.constant 0 : index
    %c0_19 = arith.constant 0 : index
    %c0_20 = arith.constant 0 : index
    %36 = vector.load %arg3[%c0_18, %c0_19, %c0_20] : memref<2x16x64xf32, #tpu.memory_space<vmem>>, vector<2x16x64xf32>
    tpu.vector_store %arg3[%c0_18, %c0_19, %c0_20], %35 {strides = array<i32>} : memref<2x16x64xf32, #tpu.memory_space<vmem>>, vector<2x16x64xf32>,
    return
  }
  func.func @transform_0(%arg0: i32) -> i32 {
    %c0_i32 = arith.constant 0 : i32
    %c0_i32_0 = arith.constant 0 : i32
    return %c0_i32 : i32
  }
  func.func @transform_1(%arg0: i32) -> (i32, i32, i32) {
    %c0_i32 = arith.constant 0 : i32
    %c0_i32_0 = arith.constant 0 : i32
    %c0_i32_1 = arith.constant 0 : i32
    return %arg0, %c0_i32, %c0_i32_0 : i32, i32, i32
  }
  func.func @transform_2(%arg0: i32) -> (i32, i32, i32) {
    %c0_i32 = arith.constant 0 : i32
    %c0_i32_0 = arith.constant 0 : i32
    %c0_i32_1 = arith.constant 0 : i32
    return %arg0, %c0_i32, %c0_i32_0 : i32, i32, i32
  }
}

</mosaic_0001>

<llo_original>
// kernel: tpu_custom_call.1
$region0: #{tpu_custom_call.1}
  #allocation0 [shape = 'u32[]', space=smem, size = 0x4, offset = 0x4, fixed_abs, tag = 'smem constant byte address 0x4 - core index']
  #allocation1 [shape = 'u32[144,128]{1,0:T(1,128)}', space=vmem, size = 0x12000, scoped, tag = 'internal scratch']
  #allocation2 [shape = 'f32[2,32,1]{2,1,0:T(8,128)}', space=vmem, size = 0x8000, scoped, tag = 'scratch operand']
  %s0 = inlined_call_operand.hbm [shape: f32[3], index: 0, kind: input, shape index: {}]
  %s1 = inlined_call_operand.hbm [shape: f32[2,16,64], index: 1, kind: input, shape index: {}]
  %s2 = inlined_call_operand.hbm [shape: f32[2,16,64], index: 2, kind: output, shape index: {}]
  %s3 = sld [smem:[#allocation0]]
  $region26: #{tpu_custom_call.1} parent=0
    _
  %s5 = ssub.s32 1, %s3
  %s6 = scalar_select 0, %s5, %s3
  $region1: #{tpu_custom_call.1} parent=0
    #allocation3 [shape = 'u8[512]{0}', space=smem, size = 0x200, scoped, tag = 'input window, operand 0, single buffered']
    #allocation4 [shape = 's32[1]{0}', space=sflag, size = 0x4, scoped, tag = 'scoped memory for tpu_custom_call.1']
    #allocation5 [shape = 's32[1]{0}', space=sflag, size = 0x4, scoped, tag = 'scoped memory for tpu_custom_call.1']
    #allocation6 [shape = 's32[1]{0}', space=sflag, size = 0x4, scoped, tag = 'scoped memory for tpu_custom_call.1']
    #allocation7 [shape = 'u8[16384]{0}', space=vmem, size = 0x4000, scoped, tag = 'input window, operand 1, single buffered']
    #allocation8 [shape = 'u8[16384]{0}', space=vmem, size = 0x4000, scoped, tag = 'output window, operand 0, single buffered']
    %7 = vsyncpa [#allocation6], 0
    %8 = vsyncpa [#allocation4], 0
    %9 = vsyncpa [#allocation5], 0
    // Predicated region
    $region2: #{tpu_custom_call.1} parent=1 // pred_check
      _
    $region3: #{tpu_custom_call.1} parent=1 // pred_check_branch
      %11 = sbr.rel (0) target = $region5
    $region4: #{tpu_custom_call.1} parent=1 // pred_region
      %s13 = ssub.s32 16, 16
      %14 = vsyncadd [#allocation6], %s13
      %17 = dma.hbm_to_smem %s0, 16, [#allocation3], [#allocation6]
    $region5: #{tpu_custom_call.1} parent=1 // pred_fallthru
      _
    // Predicated region
    $region6: #{tpu_custom_call.1} parent=1 // pred_check
      _
    $region7: #{tpu_custom_call.1} parent=1 // pred_check_branch
      %19 = sbr.rel (0) target = $region9
    $region8: #{tpu_custom_call.1} parent=1 // pred_region
      %s21 = ssub.s32 512, 512
      %22 = vsyncadd [#allocation4], %s21
      %s23 = sshll.u32 [#allocation7], 4
      %s24 = int_to_ptr.vmem [resolvable:$true] %s23
      %29 = dma.hbm_to_vmem [thread:$0]  %s1, 512, %s24, [#allocation4], 128, 128, 8
    $region9: #{tpu_custom_call.1} parent=1 // pred_fallthru
      _
    // Predicated region
    $region10: #{tpu_custom_call.1} parent=1 // pred_check
      _
    $region11: #{tpu_custom_call.1} parent=1 // pred_check_branch
      %31 = sbr.rel (0) target = $region13
    $region12: #{tpu_custom_call.1} parent=1 // pred_region
      %32 = dma.done [#allocation6], 16
    $region13: #{tpu_custom_call.1} parent=1 // pred_fallthru
      _
    // Predicated region
    $region14: #{tpu_custom_call.1} parent=1 // pred_check
      _
    $region15: #{tpu_custom_call.1} parent=1 // pred_check_branch
      %34 = sbr.rel (0) target = $region17
    $region16: #{tpu_custom_call.1} parent=1 // pred_region
      %35 = dma.done [#allocation4], 512
    $region17: #{tpu_custom_call.1} parent=1 // pred_fallthru
      _
    %36 = sfence
    %v37 = vld [vmem:[#allocation7] sm:$0xff]
    %v38 = vld [vmem:[#allocation7 + $0x8] sm:$0xff]
    %v39 = vld [vmem:[#allocation7 + $0x10] sm:$0xff]
    %v40 = vld [vmem:[#allocation7 + $0x18] sm:$0xff]
    %vm41 = vcmask 523264
    %v42 = vsel %vm41, %v37, 0.0
    %43 = vadd.xlane.f32.xlu0 %v42
    %v44 = vpop.xlane.xlu0 %43
    %v45 = vsel %vm41, %v38, 0.0
    %46 = vadd.xlane.f32.xlu0 %v45
    %v47 = vpop.xlane.xlu0 %46
    %v48 = vsel %vm41, %v39, 0.0
    %49 = vadd.xlane.f32.xlu0 %v48
    %v50 = vpop.xlane.xlu0 %49
    %v51 = vsel %vm41, %v40, 0.0
    %52 = vadd.xlane.f32.xlu0 %v51
    %v53 = vpop.xlane.xlu0 %52
    %v54 = vsel %vm41, %v37, -inf
    %55 = vmax.xlane.f32.xlu0 %v54
    %v56 = vpop.xlane.xlu0 %55
    %v57 = vsel %vm41, %v38, -inf
    %58 = vmax.xlane.f32.xlu0 %v57
    %v59 = vpop.xlane.xlu0 %58
    %v60 = vsel %vm41, %v39, -inf
    %61 = vmax.xlane.f32.xlu0 %v60
    %v62 = vpop.xlane.xlu0 %61
    %v63 = vsel %vm41, %v40, -inf
    %64 = vmax.xlane.f32.xlu0 %v63
    %v65 = vpop.xlane.xlu0 %64
    %v66 = vmul.f32 %v44, 0.015625
    %v67 = vmul.f32 %v47, 0.015625
    %v68 = vmul.f32 %v50, 0.015625
    %v69 = vmul.f32 %v53, 0.015625
    %v70 = vadd.f32 %v66, %v56
    %v71 = vadd.f32 %v67, %v59
    %v72 = vadd.f32 %v68, %v62
    %v73 = vadd.f32 %v69, %v65
    %vm74 = vcmask 7168
    %75 = vst.msk [vmem:[#allocation2] sm:$0xff] %vm74, 0.0
    %76 = vst.msk [vmem:[#allocation2 + $0x8] sm:$0xff] %vm74, 0.0
    %77 = vst.msk [vmem:[#allocation2 + $0x10] sm:$0xff] %vm74, 0.0
    %78 = vst.msk [vmem:[#allocation2 + $0x18] sm:$0xff] %vm74, 0.0
    %79 = vst.msk [vmem:[#allocation2 + $0x20] sm:$0xff] %vm74, 0.0
    %80 = vst.msk [vmem:[#allocation2 + $0x28] sm:$0xff] %vm74, 0.0
    %81 = vst.msk [vmem:[#allocation2 + $0x30] sm:$0xff] %vm74, 0.0
    %82 = vst.msk [vmem:[#allocation2 + $0x38] sm:$0xff] %vm74, 0.0
    %83 = vst.msk [vmem:[#allocation2 + $0x8] sm:$0xff] %vm74, %v70
    %84 = vst.msk [vmem:[#allocation2 + $0x10] sm:$0xff] %vm74, %v71
    %85 = vst.msk [vmem:[#allocation2 + $0x28] sm:$0xff] %vm74, %v72
    %86 = vst.msk [vmem:[#allocation2 + $0x30] sm:$0xff] %vm74, %v73
    %v87 = vld [vmem:[#allocation2] sm:$0xff]
    %v88 = vld [vmem:[#allocation2 + $0x8] sm:$0xff]
    %v89 = vld [vmem:[#allocation2 + $0x10] sm:$0xff]
    %v90 = vld [vmem:[#allocation2 + $0x18] sm:$0xff]
    %v91 = vld [vmem:[#allocation2 + $0x20] sm:$0xff]
    %v92 = vld [vmem:[#allocation2 + $0x28] sm:$0xff]
    %v93 = vld [vmem:[#allocation2 + $0x30] sm:$0xff]
    %v94 = vld [vmem:[#allocation2 + $0x38] sm:$0xff]
    %s95 = sld [smem:[#allocation3]]
    %v96 = vstv %s95
    %v97 = vmul.f32 %v96, %v87
    %v98 = vmul.f32 %v96, %v88
    %v99 = vmul.f32 %v96, %v89
    %v100 = vmul.f32 %v96, %v91
    %v101 = vmul.f32 %v96, %v92
    %v102 = vmul.f32 %v96, %v93
    %s103 = sld [smem:[#allocation3 + $0x1]]
    %v104 = vstv %s103
    %v105 = vmul.f32 %v104, %v88
    %v106 = vmul.f32 %v104, %v89
    %v107 = vmul.f32 %v104, %v92
    %v108 = vmul.f32 %v104, %v93
    %vm113 = vcmask 1046528
    %v114 = vrot.slane %v105, 1
    %v115 = vrot.slane %v106, 1
    %v116 = vsel %vm113, %v114, %v115
    %v117 = vrot.slane %v107, 1
    %v118 = vrot.slane %v108, 1
    %v119 = vsel %vm113, %v117, %v118
    %v126 = vadd.f32 %v97, %v114
    %v127 = vadd.f32 %v98, %v116
    %v128 = vadd.f32 %v99, %v115
    %v129 = vadd.f32 %v100, %v117
    %v130 = vadd.f32 %v101, %v119
    %v131 = vadd.f32 %v102, %v118
    %s132 = sld [smem:[#allocation3 + $0x2]]
    %v133 = vstv %s132
    %v134 = vmul.f32 %v133, %v88
    %v135 = vmul.f32 %v133, %v89
    %v136 = vmul.f32 %v133, %v90
    %v137 = vmul.f32 %v133, %v92
    %v138 = vmul.f32 %v133, %v93
    %v139 = vmul.f32 %v133, %v94
    %vm146 = vcmask 1045504
    %v147 = vrot.slane %v134, 2
    %v148 = vrot.slane %v135, 2
    %v149 = vsel %vm146, %v147, %v148
    %v150 = vrot.slane %v136, 2
    %v151 = vsel %vm146, %v148, %v150
    %v152 = vrot.slane %v137, 2
    %v153 = vrot.slane %v138, 2
    %v154 = vsel %vm146, %v152, %v153
    %v155 = vrot.slane %v139, 2
    %v156 = vsel %vm146, %v153, %v155
    %v163 = vadd.f32 %v126, %v147
    %v164 = vadd.f32 %v127, %v149
    %v165 = vadd.f32 %v128, %v151
    %v166 = vadd.f32 %v129, %v152
    %v167 = vadd.f32 %v130, %v154
    %v168 = vadd.f32 %v131, %v156
    %v169 = vadd.f32 %v163, 3.0
    %v170 = vadd.f32 %v164, 3.0
    %v171 = vadd.f32 %v165, 3.0
    %v172 = vadd.f32 %v166, 3.0
    %v173 = vadd.f32 %v167, 3.0
    %v174 = vadd.f32 %v168, 3.0
    %v175 = vmax.f32 %v169, 0.0
    %v176 = vmax.f32 %v170, 0.0
    %v177 = vmax.f32 %v171, 0.0
    %v178 = vmax.f32 %v172, 0.0
    %v179 = vmax.f32 %v173, 0.0
    %v180 = vmax.f32 %v174, 0.0
    %v181 = vmin.f32 %v175, 6.0
    %v182 = vmin.f32 %v176, 6.0
    %v183 = vmin.f32 %v177, 6.0
    %v184 = vmin.f32 %v178, 6.0
    %v185 = vmin.f32 %v179, 6.0
    %v186 = vmin.f32 %v180, 6.0
    %v187 = vmul.f32 %v181, 0.16666667
    %v188 = vmul.f32 %v182, 0.16666667
    %v189 = vmul.f32 %v183, 0.16666667
    %v190 = vmul.f32 %v184, 0.16666667
    %v191 = vmul.f32 %v185, 0.16666667
    %v192 = vmul.f32 %v186, 0.16666667
    %194 = vset.pattern.permute.xlu0 0
    %195 = vperm.xlu0 %194, %v187
    %v196 = vpop.permute.xlu0 %195
    %198 = vset.pattern.permute.xlu0 0
    %199 = vperm.xlu0 %198, %v188
    %v200 = vpop.permute.xlu0 %199
    %202 = vset.pattern.permute.xlu0 0
    %203 = vperm.xlu0 %202, %v189
    %v204 = vpop.permute.xlu0 %203
    %206 = vset.pattern.permute.xlu0 0
    %207 = vperm.xlu0 %206, %v190
    %v208 = vpop.permute.xlu0 %207
    %210 = vset.pattern.permute.xlu0 0
    %211 = vperm.xlu0 %210, %v191
    %v212 = vpop.permute.xlu0 %211
    %214 = vset.pattern.permute.xlu0 0
    %215 = vperm.xlu0 %214, %v192
    %v216 = vpop.permute.xlu0 %215
    %vm217 = vcmask 1040384
    %v218 = vrot.slane %v196, 7
    %v219 = vrot.slane %v200, 7
    %v220 = vsel %vm217, %v218, %v219
    %v221 = vrot.slane %v204, 7
    %v222 = vsel %vm217, %v219, %v221
    %v223 = vrot.slane %v208, 7
    %v224 = vrot.slane %v212, 7
    %v225 = vsel %vm217, %v223, %v224
    %v226 = vrot.slane %v216, 7
    %v227 = vsel %vm217, %v224, %v226
    %v232 = vmul.f32 %v37, %v220
    %v233 = vmul.f32 %v38, %v222
    %v234 = vmul.f32 %v39, %v225
    %v235 = vmul.f32 %v40, %v227
    %236 = vst.msk [vmem:[#allocation8] sm:$0xff] %vm41, %v232
    %237 = vst.msk [vmem:[#allocation8 + $0x8] sm:$0xff] %vm41, %v233
    %238 = vst.msk [vmem:[#allocation8 + $0x10] sm:$0xff] %vm41, %v234
    %239 = vst.msk [vmem:[#allocation8 + $0x18] sm:$0xff] %vm41, %v235
    // Predicated region
    $region18: #{tpu_custom_call.1} parent=1 // pred_check
      _
    $region19: #{tpu_custom_call.1} parent=1 // pred_check_branch
      %241 = sbr.rel (0) target = $region21
    $region20: #{tpu_custom_call.1} parent=1 // pred_region
      %s243 = ssub.s32 512, 512
      %244 = vsyncadd [#allocation5], %s243
      %s245 = sshll.u32 [#allocation8], 4
      %s246 = int_to_ptr.vmem [resolvable:$true] %s245
      %251 = dma.vmem_to_hbm [thread:$0]  %s246, 512, %s2, [#allocation5], 128, 128, 8
    $region21: #{tpu_custom_call.1} parent=1 // pred_fallthru
      _
    // Predicated region
    $region22: #{tpu_custom_call.1} parent=1 // pred_check
      _
    $region23: #{tpu_custom_call.1} parent=1 // pred_check_branch
      %253 = sbr.rel (0) target = $region25
    $region24: #{tpu_custom_call.1} parent=1 // pred_region
      %254 = dma.done [#allocation5], 512
    $region25: #{tpu_custom_call.1} parent=1 // pred_fallthru
      _
    %255 = vsyncpa [#allocation4], 1
    %256 = vsyncpa [#allocation5], 1
    %257 = vsyncpa [#allocation6], 1

</llo_original>
